<compile_context>
chip_gen: v6e
topology: v6e:2x2x1
jax: 0.10.0
libtpu: 0.0.40
codegen_flags: <defaults>
</compile_context>

<pallas_src>
import functools

import jax
import jax.numpy as jnp
from jax.experimental import pallas as pl
from jax.experimental.pallas import tpu as pltpu


def _qkv_proj_kernel(x_ref, w_ref, q_ref, k_ref, v_ref):
    # x_ref: (1, Tr, C) bf16 activations
    # w_ref: (C, 3C)    bf16 fused QKV weight (Q columns pre-scaled by 1/sqrt(D))
    # q/k/v_ref out: (1, Tr, C) bf16, lane-dense
    C = x_ref.shape[-1]
    qkv = jnp.dot(x_ref[0], w_ref[...],
                  preferred_element_type=jnp.float32)        # (Tr, 3C), one MXU pass
    q_ref[0] = qkv[:, 0 * C:1 * C].astype(q_ref.dtype)
    k_ref[0] = qkv[:, 1 * C:2 * C].astype(k_ref.dtype)
    v_ref[0] = qkv[:, 2 * C:3 * C].astype(v_ref.dtype)


def _flash_attn_kernel(q_ref, k_ref, v_ref, wproj_ref, bproj_ref, o_ref,
                       m_scr, l_scr, acc_scr, *, tq, tk):
    # q_ref: (1, H, Tq, D) bf16 (pre-scaled); k_ref/v_ref: (1, H, Tk, D) bf16
    # wproj_ref: (H, D, C) bf16; bproj_ref: (1, C) f32; o_ref: (1, Tq, C)
    iq = pl.program_id(1)
    ik = pl.program_id(2)
    nk = pl.num_programs(2)
    n_head = acc_scr.shape[0]

    @pl.when(ik == 0)
    def _init():
        m_scr[...] = jnp.full(m_scr.shape, -jnp.inf, dtype=m_scr.dtype)
        l_scr[...] = jnp.zeros(l_scr.shape, dtype=l_scr.dtype)
        acc_scr[...] = jnp.zeros(acc_scr.shape, dtype=acc_scr.dtype)

    q_start = iq * tq
    k_start = ik * tk

    def _scores():
        return jnp.einsum("hqd,hkd->hqk", q_ref[0], k_ref[0],
                          preferred_element_type=jnp.float32)   # (H, Tq, Tk)

    def _online_update(s):
        m_prev = m_scr[...]
        m_new = jnp.maximum(m_prev, jnp.max(s, axis=-1, keepdims=True))
        alpha = jnp.exp(m_prev - m_new)
        p = jnp.exp(s - m_new)                      # unnormalized probabilities
        l_scr[...] = alpha * l_scr[...] + jnp.sum(p, axis=-1, keepdims=True)
        acc_scr[...] = alpha * acc_scr[...] + jnp.einsum(
            "hqk,hkd->hqd", p.astype(v_ref.dtype), v_ref[0],
            preferred_element_type=jnp.float32)
        m_scr[...] = m_new

    # Block classification w.r.t. the causal diagonal.
    below_diag = (k_start + tk - 1) <= q_start            # fully unmasked
    needed = k_start < q_start + tq                        # has any unmasked entry
    on_diag = jnp.logical_and(needed, jnp.logical_not(below_diag))

    @pl.when(below_diag)
    def _compute_unmasked():
        _online_update(_scores())

    @pl.when(on_diag)
    def _compute_masked():
        s = _scores()
        row = q_start + jax.lax.broadcasted_iota(jnp.int32, (tq, tk), 0)
        col = k_start + jax.lax.broadcasted_iota(jnp.int32, (tq, tk), 1)
        s = jnp.where((col <= row)[None, :, :], s, -1e30)  # finite mask: no NaN
        _online_update(s)

    @pl.when(ik == nk - 1)
    def _finalize():
        inv_l = pl.reciprocal(l_scr[...], approx=True)              # EUP slot
        y = (acc_scr[...] * inv_l).astype(jnp.bfloat16)             # (H, Tq, D)
        # Output projection accumulated head-by-head into a single (Tq, C) f32
        # value: no (H, Tq, C) intermediate is ever materialized.
        out = jnp.dot(y[0], wproj_ref[0], preferred_element_type=jnp.float32)
        for h in range(1, n_head):
            out = out + jnp.dot(y[h], wproj_ref[h],
                                preferred_element_type=jnp.float32)
        o_ref[0] = (out + bproj_ref[...]).astype(o_ref.dtype)


def multi_head_attention(x, w_qkv, w_proj, b_proj, *, n_head,
                         row_block=256, q_block=256, kv_block=256):
    """x: (B, T, C) f32; w_qkv: (C, 3C); w_proj: (C, C); b_proj: (C,)."""
    B, T, C = x.shape
    assert C % n_head == 0
    D = C // n_head
    scale = 1.0 / (float(D) ** 0.5)

    tr = min(row_block, T)
    tq = min(q_block, T)
    tk = min(kv_block, T)
    assert T % tr == 0 and T % tq == 0 and T % tk == 0

    # Prepared once outside the kernels, bf16 for the MXU.
    x_bf16 = x.astype(jnp.bfloat16)                       # cast activations once
    # Fold 1/sqrt(D) into the Q columns of the fused QKV weight.
    w_fused = jnp.concatenate([w_qkv[:, :C] * scale, w_qkv[:, C:]],
                              axis=1).astype(jnp.bfloat16)          # (C, 3C)
    wproj_h = w_proj.reshape(n_head, D, C).astype(jnp.bfloat16)     # (H, D, C)
    bproj2d = b_proj.reshape(1, C).astype(jnp.float32)

    vmem_limit = 32 * 1024 * 1024   # v7x-safe; raise alongside 512 tiles on v6e/v5e

    # ---- Kernel 1: fused (all-heads) QKV projection, lane-dense outputs ----
    bt_shape = jax.ShapeDtypeStruct((B, T, C), jnp.bfloat16)
    q_bt, k_bt, v_bt = pl.pallas_call(
        _qkv_proj_kernel,
        out_shape=(bt_shape, bt_shape, bt_shape),
        grid_spec=pltpu.PrefetchScalarGridSpec(
            num_scalar_prefetch=0,
            grid=(B, T // tr),
            in_specs=[
                pl.BlockSpec((1, tr, C), lambda b, r: (b, r, 0)),
                pl.BlockSpec((C, 3 * C), lambda b, r: (0, 0)),   # resident weight
            ],
            out_specs=[
                pl.BlockSpec((1, tr, C), lambda b, r: (b, r, 0)),
                pl.BlockSpec((1, tr, C), lambda b, r: (b, r, 0)),
                pl.BlockSpec((1, tr, C), lambda b, r: (b, r, 0)),
            ],
        ),
        compiler_params=pltpu.CompilerParams(
            dimension_semantics=("parallel", "parallel"),
            vmem_limit_bytes=vmem_limit,
        ),
    )(x_bf16, w_fused)

    # Head-major layout for the attention kernel (single XLA reshape+transpose
    # in the wrapper — keeps every Pallas store lane-dense).
    q_hm = q_bt.reshape(B, T, n_head, D).transpose(0, 2, 1, 3)   # (B, H, T, D)
    k_hm = k_bt.reshape(B, T, n_head, D).transpose(0, 2, 1, 3)
    v_hm = v_bt.reshape(B, T, n_head, D).transpose(0, 2, 1, 3)

    # Clamp the K/V block index to the causal diagonal: KV blocks that the
    # causal pl.when skips keep the previously-resident block index and
    # therefore generate no DMA.
    def _kv_index_map(b, i, j):
        last_needed = (i * tq + tq - 1) // tk
        return (b, 0, jnp.minimum(j, last_needed), 0)

    # ---- Kernel 2: flash attention + output projection ---------------------
    out = pl.pallas_call(
        functools.partial(_flash_attn_kernel, tq=tq, tk=tk),
        out_shape=jax.ShapeDtypeStruct((B, T, C), x.dtype),
        grid_spec=pltpu.PrefetchScalarGridSpec(
            num_scalar_prefetch=0,
            grid=(B, T // tq, T // tk),
            in_specs=[
                pl.BlockSpec((1, n_head, tq, D), lambda b, i, j: (b, 0, i, 0)),
                pl.BlockSpec((1, n_head, tk, D), _kv_index_map),
                pl.BlockSpec((1, n_head, tk, D), _kv_index_map),
                pl.BlockSpec((n_head, D, C), lambda b, i, j: (0, 0, 0)),
                pl.BlockSpec((1, C), lambda b, i, j: (0, 0)),
            ],
            out_specs=pl.BlockSpec((1, tq, C), lambda b, i, j: (b, i, 0)),
            scratch_shapes=[
                pltpu.VMEM((n_head, tq, 1), jnp.float32),   # m (running max)
                pltpu.VMEM((n_head, tq, 1), jnp.float32),   # l (running denom)
                pltpu.VMEM((n_head, tq, D), jnp.float32),   # acc (p @ v)
            ],
        ),
        compiler_params=pltpu.CompilerParams(
            dimension_semantics=("parallel", "parallel", "arbitrary"),
            vmem_limit_bytes=vmem_limit,
        ),
    )(q_hm, k_hm, v_hm, wproj_h, bproj2d)
    return out


def _reference(x, w_qkv, w_proj, b_proj, n_head):
    # plain-JAX reference mirroring the PyTorch forward (eval mode)
    B, T, C = x.shape
    D = C // n_head
    qkv = x @ w_qkv
    q, k, v = jnp.split(qkv, 3, axis=-1)
    q = q.reshape(B, T, n_head, D).transpose(0, 2, 1, 3)
    k = k.reshape(B, T, n_head, D).transpose(0, 2, 1, 3)
    v = v.reshape(B, T, n_head, D).transpose(0, 2, 1, 3)
    att = jnp.einsum("bhtd,bhsd->bhts", q, k) / jnp.sqrt(D).astype(x.dtype)
    mask = jnp.tril(jnp.ones((T, T), dtype=bool))
    att = jnp.where(mask, att, -jnp.inf)
    att = jax.nn.softmax(att, axis=-1)
    y = jnp.einsum("bhts,bhsd->bhtd", att, v)
    y = y.transpose(0, 2, 1, 3).reshape(B, T, C)
    return y @ w_proj + b_proj


if __name__ == "__main__":
    B, T, n_embd, n_head = 2, 8, 32, 4

    key = jax.random.PRNGKey(0)
    kx, kqkv, kproj, kb = jax.random.split(key, 4)

    x = jax.random.normal(kx, (B, T, n_embd), dtype=jnp.float32)
    bound = 1.0 / (n_embd ** 0.5)
    w_qkv = jax.random.uniform(kqkv, (n_embd, 3 * n_embd),
                               minval=-bound, maxval=bound, dtype=jnp.float32)
    w_proj = jax.random.uniform(kproj, (n_embd, n_embd),
                                minval=-bound, maxval=bound, dtype=jnp.float32)
    b_proj = jax.random.uniform(kb, (n_embd,),
                                minval=-bound, maxval=bound, dtype=jnp.float32)

    out = multi_head_attention(x, w_qkv, w_proj, b_proj, n_head=n_head)
    out = jax.block_until_ready(out)

    ref = _reference(x, w_qkv, w_proj, b_proj, n_head)
    assert out.shape == (B, T, n_embd)
    max_err = float(jnp.max(jnp.abs(out - ref)))
    # bf16 MXU operands (f32 accumulation) vs f32 reference -> loosened tolerance
    assert jnp.allclose(out, ref, atol=3e-2, rtol=3e-2), \
        f"mismatch vs reference, max abs err = {max_err}"

    print("KERNEL_OK")
</pallas_src>

<mosaic_0001>
module attributes {stable_mosaic.version = 11 : i64} {
  func.func @_qkv_proj_kernel(%arg0: i32, %arg1: i32, %arg2: memref<1x8x32xbf16, #tpu.memory_space<vmem>>, %arg3: memref<32x96xbf16, #tpu.memory_space<vmem>>, %arg4: memref<1x8x32xbf16, #tpu.memory_space<vmem>>, %arg5: memref<1x8x32xbf16, #tpu.memory_space<vmem>>, %arg6: memref<1x8x32xbf16, #tpu.memory_space<vmem>>) attributes {dimension_semantics = [#tpu.dimension_semantics<parallel>, #tpu.dimension_semantics<parallel>], iteration_bounds = array<i64: 2, 1>, scalar_prefetch = 0 : i64, scratch_operands = 0 : i64, tpu.core_type = #tpu.core_type<tc>, window_params = [{transform_indices = @transform_0, window_bounds = array<i64: 1, 8, 32>}, {pipeline_mode = #tpu.pipeline_mode<synchronous>, transform_indices = @transform_1, window_bounds = array<i64: 32, 96>}, {transform_indices = @transform_2, window_bounds = array<i64: 1, 8, 32>}, {transform_indices = @transform_3, window_bounds = array<i64: 1, 8, 32>}, {transform_indices = @transform_4, window_bounds = array<i64: 1, 8, 32>}]} {
    %c0 = arith.constant 0 : index
    %c0_0 = arith.constant 0 : index
    %c0_1 = arith.constant 0 : index
    %0 = vector.load %arg2[%c0, %c0_0, %c0_1] : memref<1x8x32xbf16, #tpu.memory_space<vmem>>, vector<1x8x32xbf16>
    %1 = vector.shape_cast %0 : vector<1x8x32xbf16> to vector<8x32xbf16>
    %c0_2 = arith.constant 0 : index
    %c0_3 = arith.constant 0 : index
    %2 = vector.load %arg3[%c0_2, %c0_3] : memref<32x96xbf16, #tpu.memory_space<vmem>>, vector<32x96xbf16>
    %cst = arith.constant dense<0.000000e+00> : vector<8x96xf32>
    %3 = tpu.matmul %1, %2, %cst {dimension_numbers = #tpu.dot_dimension_numbers<[1], [0], [0], [1], [0, 0, 1, 1], [], []>} : vector<8x32xbf16>, vector<32x96xbf16>, vector<8x96xf32> -> vector<8x96xf32>
    %4 = vector.extract_strided_slice %3 {offsets = [0, 0], sizes = [8, 32], strides = [1, 1]} : vector<8x96xf32> to vector<8x32xf32>
    %5 = arith.truncf %4 : vector<8x32xf32> to vector<8x32xbf16>
    %c0_4 = arith.constant 0 : index
    %c0_5 = arith.constant 0 : index
    %c0_6 = arith.constant 0 : index
    %6 = vector.load %arg4[%c0_4, %c0_5, %c0_6] : memref<1x8x32xbf16, #tpu.memory_space<vmem>>, vector<1x8x32xbf16>
    %7 = vector.shape_cast %6 : vector<1x8x32xbf16> to vector<8x32xbf16>
    %8 = vector.shape_cast %5 : vector<8x32xbf16> to vector<1x8x32xbf16>
    tpu.vector_store %arg4[%c0_4, %c0_5, %c0_6], %8 {strides = array<i32>} : memref<1x8x32xbf16, #tpu.memory_space<vmem>>, vector<1x8x32xbf16>,
    %9 = vector.extract_strided_slice %3 {offsets = [0, 32], sizes = [8, 32], strides = [1, 1]} : vector<8x96xf32> to vector<8x32xf32>
    %10 = arith.truncf %9 : vector<8x32xf32> to vector<8x32xbf16>
    %c0_7 = arith.constant 0 : index
    %c0_8 = arith.constant 0 : index
    %c0_9 = arith.constant 0 : index
    %11 = vector.load %arg5[%c0_7, %c0_8, %c0_9] : memref<1x8x32xbf16, #tpu.memory_space<vmem>>, vector<1x8x32xbf16>
    %12 = vector.shape_cast %11 : vector<1x8x32xbf16> to vector<8x32xbf16>
    %13 = vector.shape_cast %10 : vector<8x32xbf16> to vector<1x8x32xbf16>
    tpu.vector_store %arg5[%c0_7, %c0_8, %c0_9], %13 {strides = array<i32>} : memref<1x8x32xbf16, #tpu.memory_space<vmem>>, vector<1x8x32xbf16>,
    %14 = vector.extract_strided_slice %3 {offsets = [0, 64], sizes = [8, 32], strides = [1, 1]} : vector<8x96xf32> to vector<8x32xf32>
    %15 = arith.truncf %14 : vector<8x32xf32> to vector<8x32xbf16>
    %c0_10 = arith.constant 0 : index
    %c0_11 = arith.constant 0 : index
    %c0_12 = arith.constant 0 : index
    %16 = vector.load %arg6[%c0_10, %c0_11, %c0_12] : memref<1x8x32xbf16, #tpu.memory_space<vmem>>, vector<1x8x32xbf16>
    %17 = vector.shape_cast %16 : vector<1x8x32xbf16> to vector<8x32xbf16>
    %18 = vector.shape_cast %15 : vector<8x32xbf16> to vector<1x8x32xbf16>
    tpu.vector_store %arg6[%c0_10, %c0_11, %c0_12], %18 {strides = array<i32>} : memref<1x8x32xbf16, #tpu.memory_space<vmem>>, vector<1x8x32xbf16>,
    return
  }
  func.func @transform_0(%arg0: i32, %arg1: i32) -> (i32, i32, i32) {
    %c0_i32 = arith.constant 0 : i32
    %c0_i32_0 = arith.constant 0 : i32
    return %arg0, %arg1, %c0_i32 : i32, i32, i32
  }
  func.func @transform_1(%arg0: i32, %arg1: i32) -> (i32, i32) {
    %c0_i32 = arith.constant 0 : i32
    %c0_i32_0 = arith.constant 0 : i32
    %c0_i32_1 = arith.constant 0 : i32
    return %c0_i32, %c0_i32_0 : i32, i32
  }
  func.func @transform_2(%arg0: i32, %arg1: i32) -> (i32, i32, i32) {
    %c0_i32 = arith.constant 0 : i32
    %c0_i32_0 = arith.constant 0 : i32
    return %arg0, %arg1, %c0_i32 : i32, i32, i32
  }
  func.func @transform_3(%arg0: i32, %arg1: i32) -> (i32, i32, i32) {
    %c0_i32 = arith.constant 0 : i32
    %c0_i32_0 = arith.constant 0 : i32
    return %arg0, %arg1, %c0_i32 : i32, i32, i32
  }
  func.func @transform_4(%arg0: i32, %arg1: i32) -> (i32, i32, i32) {
    %c0_i32 = arith.constant 0 : i32
    %c0_i32_0 = arith.constant 0 : i32
    return %arg0, %arg1, %c0_i32 : i32, i32, i32
  }
}

</mosaic_0001>

<llo_original>
// kernel: tpu_custom_call.1
$region0: #{tpu_custom_call.1}
  #allocation0 [shape = 'u32[]', space=smem, size = 0x4, offset = 0x4, fixed_abs, tag = 'smem constant byte address 0x4 - core index']
  #allocation1 [shape = 'u32[144,128]{1,0:T(1,128)}', space=vmem, size = 0x12000, scoped, tag = 'internal scratch']
  %s0 = inlined_call_operand.hbm [shape: bf16[2,8,32], index: 0, kind: input, shape index: {}]
  %s1 = inlined_call_operand.hbm [shape: bf16[32,96], index: 1, kind: input, shape index: {}]
  %s2 = inlined_call_operand.hbm [shape: bf16[2,8,32], index: 2, kind: output, shape index: {0}]
  %s3 = inlined_call_operand.hbm [shape: bf16[2,8,32], index: 3, kind: output, shape index: {1}]
  %s4 = inlined_call_operand.hbm [shape: bf16[2,8,32], index: 4, kind: output, shape index: {2}]
  %5 = xla_tuple %s2, %s3, %s4
  %s6 = sld [smem:[#allocation0]]
  $region65: #{tpu_custom_call.1} parent=0
    _
  %s8 = ssub.s32 1, %s6
  %s9 = scalar_select 0, %s8, %s6
  $region1: #{tpu_custom_call.1} parent=0
    #allocation2 [shape = 'u8[4096]{0}', space=vmem, size = 0x1000, scoped, tag = 'input window, operand 0']
    #allocation3 [shape = 's32[2]{0}', space=sflag, size = 0x8, scoped, tag = 'scoped memory for tpu_custom_call.1']
    #allocation4 [shape = 's32[2]{0}', space=sflag, size = 0x8, scoped, tag = 'scoped memory for tpu_custom_call.1']
    #allocation5 [shape = 'u8[8192]{0}', space=vmem, size = 0x2000, scoped, tag = 'input window, operand 1, single buffered']
    #allocation6 [shape = 's32[1]{0}', space=sflag, size = 0x4, scoped, tag = 'scoped memory for tpu_custom_call.1']
    #allocation7 [shape = 'u8[4096]{0}', space=vmem, size = 0x1000, scoped, tag = 'output window, operand 0']
    #allocation8 [shape = 'u8[4096]{0}', space=vmem, size = 0x1000, scoped, tag = 'output window, operand 1']
    #allocation9 [shape = 's32[2]{0}', space=sflag, size = 0x8, scoped, tag = 'scoped memory for tpu_custom_call.1']
    #allocation10 [shape = 'u8[4096]{0}', space=vmem, size = 0x1000, scoped, tag = 'output window, operand 2']
    %10 = vsyncpa [#allocation3], 0
    %s11 = scalar_lea.sflag [#allocation3], 1
    %12 = vsyncpa %s11, 0
    %13 = vsyncpa [#allocation6], 0
    %14 = vsyncpa [#allocation4], 0
    %s15 = scalar_lea.sflag [#allocation4], 1
    %16 = vsyncpa %s15, 0
    %17 = vsyncpa [#allocation9], 0
    %s18 = scalar_lea.sflag [#allocation9], 1
    %19 = vsyncpa %s18, 0
    loop: start=0, step=1, limit=4
    $region2: #{tpu_custom_call.1} parent=1 // loop_pre_header
      _
    $region3: #{tpu_custom_call.1} parent=1 // loop_header
      %s21 = sphi 0, %s25
      %p22 = scmp.ge.s32.totalorder %s21, 4
      %s28 = sphi 0, %s40
      %s29 = sphi 0, %s36
      %s30 = sphi 0, %s28
      %s31 = sphi 0, %s29
      %s32 = sphi 0, %s30
      %s33 = sphi 0, %s31
      %s45 = sphi 0, %s47
      %s48 = sphi 0, %s45
      %s49 = sphi 0, %s48
      %s65 = sphi 0, %s49
      %s69 = sphi 0, %s69
      %s71 = sphi 0, %s69
      %s72 = sphi 0, %s71
      %s86 = sphi 0, %s72
      %s94 = sphi 0, %s96
      %s97 = sphi 0, %s94
      %s98 = sphi 0, %s97
      %s114 = sphi 0, %s98
      %s122 = sphi 0, %s124
      %s125 = sphi 0, %s122
      %s126 = sphi 0, %s125
      %s142 = sphi 0, %s126
      %s150 = sphi 0, %s152
      %s153 = sphi 0, %s150
      %s154 = sphi 0, %s153
      %s170 = sphi 0, %s154
    $region4: #{tpu_custom_call.1} parent=1 // loop_header_branch
      %24 = sbr.rel (%p22) target = $region8
    $region5: #{tpu_custom_call.1} parent=1 // loop_body
      %s26 = ssub.s32 %s21, 1
      %s27 = ssub.s32 %s21, 2
      %s34 = sadd.s32 1, %s29
      %p35 = scmp.ge.s32.totalorder %s34, 1
      %s36 = scalar_select %p35, 0, %s34
      %s37 = sadd.s32 1, %s28
      %s38 = scalar_select %p35, %s37, %s28
      %p39 = scmp.ge.s32.totalorder %s38, 2
      %s40 = scalar_select %p39, 0, %s38
      %s41 = ssub.s32 %s28, %s40
      %s42 = ssub.s32 %s29, %s36
      %s43 = sor.u32 %s41, %s42
      %p44 = scmp.eq.s32.totalorder %s43, 0
      %s46 = sadd.s32 %s45, 1
      %s47 = scalar_select %p44, %s45, %s46
      %p50 = pneg %p44
      %p51 = scmp.eq.s32.totalorder %s21, 1
      %p52 = por %p50, %p51
      %p53 = scmp.ne.s32.totalorder %s45, %s48
      %p54 = scmp.eq.s32.totalorder %s21, 0
      %p55 = por %p53, %p54
      %p56 = scmp.ne.s32.totalorder %s45, %s48
      %p57 = scmp.eq.s32.totalorder %s26, 1
      %p58 = por %p56, %p57
      %p59 = scmp.ne.s32.totalorder %s48, %s49
      %p60 = scmp.eq.s32.totalorder %s26, 0
      %p61 = por %p59, %p60
      %p62 = scmp.ne.s32.totalorder %s48, %s49
      %p63 = scmp.eq.s32.totalorder %s27, 1
      %p64 = por %p62, %p63
      %p66 = scmp.ne.s32.totalorder %s49, %s65
      %p67 = scmp.eq.s32.totalorder %s27, 0
      %p68 = por %p66, %p67
      %s70 = sadd.s32 %s69, 1
      %p73 = scmp.eq.s32.totalorder %s21, 1
      %p74 = scmp.ne.s32.totalorder %s69, %s71
      %p75 = scmp.eq.s32.totalorder %s21, 0
      %p76 = por %p74, %p75
      %p77 = scmp.ne.s32.totalorder %s69, %s71
      %p78 = scmp.eq.s32.totalorder %s26, 1
      %p79 = por %p77, %p78
      %p80 = scmp.ne.s32.totalorder %s71, %s72
      %p81 = scmp.eq.s32.totalorder %s26, 0
      %p82 = por %p80, %p81
      %p83 = scmp.ne.s32.totalorder %s71, %s72
      %p84 = scmp.eq.s32.totalorder %s27, 1
      %p85 = por %p83, %p84
      %p87 = scmp.ne.s32.totalorder %s72, %s86
      %p88 = scmp.eq.s32.totalorder %s27, 0
      %p89 = por %p87, %p88
      %s90 = ssub.s32 %s28, %s40
      %s91 = ssub.s32 %s29, %s36
      %s92 = sor.u32 %s90, %s91
      %p93 = scmp.eq.s32.totalorder %s92, 0
      %s95 = sadd.s32 %s94, 1
      %s96 = scalar_select %p93, %s94, %s95
      %p99 = pneg %p93
      %p100 = scmp.eq.s32.totalorder %s21, 1
      %p101 = por %p99, %p100
      %p102 = scmp.ne.s32.totalorder %s94, %s97
      %p103 = scmp.eq.s32.totalorder %s21, 0
      %p104 = por %p102, %p103
      %p105 = scmp.ne.s32.totalorder %s94, %s97
      %p106 = scmp.eq.s32.totalorder %s26, 1
      %p107 = por %p105, %p106
      %p108 = scmp.ne.s32.totalorder %s97, %s98
      %p109 = scmp.eq.s32.totalorder %s26, 0
      %p110 = por %p108, %p109
      %p111 = scmp.ne.s32.totalorder %s97, %s98
      %p112 = scmp.eq.s32.totalorder %s27, 1
      %p113 = por %p111, %p112
      %p115 = scmp.ne.s32.totalorder %s98, %s114
      %p116 = scmp.eq.s32.totalorder %s27, 0
      %p117 = por %p115, %p116
      %s118 = ssub.s32 %s28, %s40
      %s119 = ssub.s32 %s29, %s36
      %s120 = sor.u32 %s118, %s119
      %p121 = scmp.eq.s32.totalorder %s120, 0
      %s123 = sadd.s32 %s122, 1
      %s124 = scalar_select %p121, %s122, %s123
      %p127 = pneg %p121
      %p128 = scmp.eq.s32.totalorder %s21, 1
      %p129 = por %p127, %p128
      %p130 = scmp.ne.s32.totalorder %s122, %s125
      %p131 = scmp.eq.s32.totalorder %s21, 0
      %p132 = por %p130, %p131
      %p133 = scmp.ne.s32.totalorder %s122, %s125
      %p134 = scmp.eq.s32.totalorder %s26, 1
      %p135 = por %p133, %p134
      %p136 = scmp.ne.s32.totalorder %s125, %s126
      %p137 = scmp.eq.s32.totalorder %s26, 0
      %p138 = por %p136, %p137
      %p139 = scmp.ne.s32.totalorder %s125, %s126
      %p140 = scmp.eq.s32.totalorder %s27, 1
      %p141 = por %p139, %p140
      %p143 = scmp.ne.s32.totalorder %s126, %s142
      %p144 = scmp.eq.s32.totalorder %s27, 0
      %p145 = por %p143, %p144
      %s146 = ssub.s32 %s28, %s40
      %s147 = ssub.s32 %s29, %s36
      %s148 = sor.u32 %s146, %s147
      %p149 = scmp.eq.s32.totalorder %s148, 0
      %s151 = sadd.s32 %s150, 1
      %s152 = scalar_select %p149, %s150, %s151
      %p155 = pneg %p149
      %p156 = scmp.eq.s32.totalorder %s21, 1
      %p157 = por %p155, %p156
      %p158 = scmp.ne.s32.totalorder %s150, %s153
      %p159 = scmp.eq.s32.totalorder %s21, 0
      %p160 = por %p158, %p159
      %p161 = scmp.ne.s32.totalorder %s150, %s153
      %p162 = scmp.eq.s32.totalorder %s26, 1
      %p163 = por %p161, %p162
      %p164 = scmp.ne.s32.totalorder %s153, %s154
      %p165 = scmp.eq.s32.totalorder %s26, 0
      %p166 = por %p164, %p165
      %p167 = scmp.ne.s32.totalorder %s153, %s154
      %p168 = scmp.eq.s32.totalorder %s27, 1
      %p169 = por %p167, %p168
      %p171 = scmp.ne.s32.totalorder %s154, %s170
      %p172 = scmp.eq.s32.totalorder %s27, 0
      %p173 = por %p171, %p172
      %p174 = scmp.le.s32.totalorder 1, %s21
      %p175 = scmp.lt.s32.totalorder %s21, 3
      %p176 = pnand %p174, %p175
      %p177 = pneg %p176
      // Predicated region
      $region9: #{tpu_custom_call.1} parent=5 // pred_check
        _
      $region10: #{tpu_custom_call.1} parent=5 // pred_check_branch
        %179 = sbr.rel (%p176) target = $region12
      $region11: #{tpu_custom_call.1} parent=5 // pred_region
        %s180 = ssub.s32 %s21, 1
        // Predicated region
        $region13: #{tpu_custom_call.1} parent=11 // pred_check
          %p181 = pneg %p82
        $region14: #{tpu_custom_call.1} parent=11 // pred_check_branch
          %183 = sbr.rel (%p181) target = $region16
        $region15: #{tpu_custom_call.1} parent=11 // pred_region
          %s185 = ssub.s32 256, 256
          %186 = vsyncadd [#allocation6], %s185
          %s187 = sshll.u32 [#allocation5], 4
          %s188 = int_to_ptr.vmem [resolvable:$true] %s187
          %193 = dma.hbm_to_vmem [thread:$0]  %s1, 256, %s188, [#allocation6], 64, 64, 4
        $region16: #{tpu_custom_call.1} parent=11 // pred_fallthru
          _
      $region12: #{tpu_custom_call.1} parent=5 // pred_fallthru
        _
      %p194 = scmp.lt.s32.totalorder %s21, 2
      // Predicated region
      $region17: #{tpu_custom_call.1} parent=5 // pred_check
        %p195 = pneg %p194
      $region18: #{tpu_custom_call.1} parent=5 // pred_check_branch
        %197 = sbr.rel (%p195) target = $region20
      $region19: #{tpu_custom_call.1} parent=5 // pred_region
        // Predicated region
        $region21: #{tpu_custom_call.1} parent=19 // pred_check
          %p198 = pneg %p55
        $region22: #{tpu_custom_call.1} parent=19 // pred_check_branch
          %200 = sbr.rel (%p198) target = $region24
        $region23: #{tpu_custom_call.1} parent=19 // pred_region
          %s201 = sand.u32 %s45, 1
          %s202 = scalar_lea.sflag [#allocation3], %s201
          %s203 = sand.u32 %s45, 1
          %s204 = smul.addr %s203, 4
          %s205 = scalar_lea.vmem [#allocation2], %s204
          %s207 = ssub.s32 64, 64
          %208 = vsyncadd %s202, %s207
          %s209 = sadd.s32 %s29, %s28
          %s210 = smul.addr %s209, 64
          %s211 = scalar_lea.hbm %s0, %s210
          %s213 = sshll.u32 %s205, 4
          %s214 = int_to_ptr.vmem [resolvable:$true] %s213
          %216 = dma.hbm_to_vmem [thread:$0]  %s211, 64, %s214, %s202
        $region24: #{tpu_custom_call.1} parent=19 // pred_fallthru
          _
      $region20: #{tpu_custom_call.1} parent=5 // pred_fallthru
        _
      %p217 = scmp.le.s32.totalorder 1, %s21
      %p218 = scmp.lt.s32.totalorder %s21, 3
      %p219 = pnand %p217, %p218
      %p220 = pneg %p219
      // Predicated region
      $region25: #{tpu_custom_call.1} parent=5 // pred_check
        _
      $region26: #{tpu_custom_call.1} parent=5 // pred_check_branch
        %222 = sbr.rel (%p219) target = $region28
      $region27: #{tpu_custom_call.1} parent=5 // pred_region
        %s223 = ssub.s32 %s21, 1
        %s224 = sand.u32 %s48, 1
        %s225 = scalar_lea.sflag [#allocation3], %s224
        %s226 = sand.u32 %s48, 1
        %s227 = smul.addr %s226, 4
        %s228 = scalar_lea.vmem [#allocation2], %s227
        // Predicated region
        $region29: #{tpu_custom_call.1} parent=27 // pred_check
          %p229 = pneg %p61
        $region30: #{tpu_custom_call.1} parent=27 // pred_check_branch
          %231 = sbr.rel (%p229) target = $region32
        $region31: #{tpu_custom_call.1} parent=27 // pred_region
          %232 = dma.done %s225, 64
        $region32: #{tpu_custom_call.1} parent=27 // pred_fallthru
          _
        // Predicated region
        $region33: #{tpu_custom_call.1} parent=27 // pred_check
          %p233 = pneg %p82
        $region34: #{tpu_custom_call.1} parent=27 // pred_check_branch
          %235 = sbr.rel (%p233) target = $region36
        $region35: #{tpu_custom_call.1} parent=27 // pred_region
          %236 = dma.done [#allocation6], 256
        $region36: #{tpu_custom_call.1} parent=27 // pred_fallthru
          _
        %s237 = sand.u32 %s48, 1
        %s238 = scalar_lea.sflag [#allocation3], %s237
        %s239 = sand.u32 %s48, 1
        %s240 = smul.addr %s239, 4
        %s241 = scalar_lea.vmem [#allocation2], %s240
        %p242 = pneg %p61
        %p243 = pneg %p58
        %p244 = pneg %p82
        %p245 = pneg %p79
        %p246 = pneg %p110
        %p247 = pneg %p107
        %s248 = sand.u32 %s97, 1
        %s249 = scalar_lea.sflag [#allocation4], %s248
        %s250 = sand.u32 %s97, 1
        %s251 = smul.addr %s250, 4
        %s252 = scalar_lea.vmem [#allocation7], %s251
        %p253 = pneg %p138
        %p254 = pneg %p135
        %s255 = sand.u32 %s26, 1
        %s256 = scalar_lea.sflag [#allocation9], %s255
        %s257 = sand.u32 %s125, 1
        %s258 = smul.addr %s257, 4
        %s259 = scalar_lea.vmem [#allocation8], %s258
        %p260 = pneg %p166
        %p261 = pneg %p163
        %s262 = sand.u32 %s26, 1
        %s263 = scalar_lea.sflag [#allocation9], %s262
        %s264 = sand.u32 %s153, 1
        %s265 = smul.addr %s264, 4
        %s266 = scalar_lea.vmem [#allocation10], %s265
        %v268 = vld [vmem:[%s228] sm:$0xf]
        %v269 = vld [vmem:[#allocation5] sm:$0xf]
        %v270 = vld [vmem:[#allocation5 + $0x4] sm:$0xf]
        %v271 = vld [vmem:[#allocation5 + $0x8] sm:$0xf]
        %v272 = vld [vmem:[#allocation5 + $0xc] sm:$0xf]
        %v277 = vunpack.c.l.b16 %v269
        %v278 = vunpack.c.l.b16 %v270
        %v279 = vunpack.c.l.b16 %v271
        %v280 = vunpack.c.l.b16 %v272
        %v281 = vpack.c.b16 %v278, %v277
        %v282 = vpack.c.b16 %v280, %v279
        %vm285 = vcmask 261120
        %v287 = vsel %vm285, %v268, 0
        %289 = vmatprep.subr.bf16.mxu0 0
        %290 = vmatpush1.bf16.msra.mxu0 0
        %291 = vmatprep.subr.bf16.mxu0 0
        %292 = vmatpush1.bf16.msra.mxu0 0
        %293 = vmatprep.subr.bf16.mxu0 0
        %294 = vmatpush1.bf16.msra.mxu0 0
        %295 = vmatprep.subr.bf16.mxu0 0
        %296 = vmatpush1.bf16.msra.mxu0 0
        %297 = vmatprep.subr.bf16.mxu0 0
        %298 = vmatpush1.bf16.msra.mxu0 0
        %299 = vmatprep.subr.bf16.mxu0 0
        %300 = vmatpush1.bf16.msra.mxu0 0
        %301 = vmatprep.subr.bf16.mxu0 0
        %302 = vmatpush1.bf16.msra.mxu0 %v282
        %303 = vmatprep.subr.bf16.mxu0 0
        %304 = vmatpush1.bf16.msra.mxu0 %v281
        %305 = vmatprep.subr.bf16.mxu0 0
        %306 = vmatpush2.bf16.msra.mxu0 0
        %307 = vmatprep.subr.bf16.mxu0 0
        %308 = vmatpush2.bf16.msra.mxu0 0
        %309 = vmatprep.subr.bf16.mxu0 0
        %310 = vmatpush2.bf16.msra.mxu0 0
        %311 = vmatprep.subr.bf16.mxu0 0
        %312 = vmatpush2.bf16.msra.mxu0 0
        %313 = vmatprep.subr.bf16.mxu0 0
        %314 = vmatpush2.bf16.msra.mxu0 0
        %315 = vmatprep.subr.bf16.mxu0 0
        %316 = vmatpush2.bf16.msra.mxu0 0
        %317 = vmatprep.subr.bf16.mxu0 0
        %318 = vmatpush2.bf16.msra.mxu0 0
        %319 = vmatprep.subr.bf16.mxu0 0
        %320 = vmatpush2.bf16.msra.mxu0 0
        %321 = vmatprep.mubr.bf16.mxu0 0
        %322 = vmatmul.mubr.bf16.gmra.mxu0 %v287
        %v323 = vpop.f32.mrf.mxu0
        %v324 = vadd.f32 0.0, %v323
        %v325 = vpop.f32.mrf.mxu0
        %v326 = vpop.f32.mrf.mxu0
        %v327 = vpop.f32.mrf.mxu0
        %328 = vdwg.mxu0
        %v329 = vpack.c.bf16 %v324, %v324
        %vm330 = vcmask 257024
        %331 = vst.msk [vmem:[%s252] sm:$0xf] %vm330, %v329
        %v333 = vunpack.c.l.b16 %v329
        %v334 = vpack.c.b16 %v333, %v333
        %335 = vrot.lane.b32.xlu0 %v334, 96
        %v336 = vpop.permute.xlu0 %335
        %338 = vst.msk [vmem:[%s259] sm:$0xf] %vm330, %v336
        %339 = vrot.lane.b32.xlu0 %v334, 64
        %v340 = vpop.permute.xlu0 %339
        %342 = vst.msk [vmem:[%s266] sm:$0xf] %vm330, %v340
        %s343 = sand.u32 %s97, 1
        %s344 = scalar_lea.sflag [#allocation4], %s343
        %s345 = sand.u32 %s97, 1
        %s346 = smul.addr %s345, 4
        %s347 = scalar_lea.vmem [#allocation7], %s346
        %s348 = sand.u32 %s26, 1
        %s349 = scalar_lea.sflag [#allocation9], %s348
        %s350 = sand.u32 %s125, 1
        %s351 = smul.addr %s350, 4
        %s352 = scalar_lea.vmem [#allocation8], %s351
        %s353 = sand.u32 %s26, 1
        %s354 = scalar_lea.sflag [#allocation9], %s353
        %s355 = sand.u32 %s153, 1
        %s356 = smul.addr %s355, 4
        %s357 = scalar_lea.vmem [#allocation10], %s356
        // Predicated region
        $region37: #{tpu_custom_call.1} parent=27 // pred_check
          %p358 = pneg %p107
        $region38: #{tpu_custom_call.1} parent=27 // pred_check_branch
          %360 = sbr.rel (%p358) target = $region40
        $region39: #{tpu_custom_call.1} parent=27 // pred_region
          %s362 = ssub.s32 64, 64
          %363 = vsyncadd %s344, %s362
          %s364 = sadd.s32 %s31, %s30
          %s365 = smul.addr %s364, 64
          %s366 = scalar_lea.hbm %s2, %s365
          %s368 = sshll.u32 %s347, 4
          %s369 = int_to_ptr.vmem [resolvable:$true] %s368
          %371 = dma.vmem_to_hbm [thread:$0]  %s369, 64, %s366, %s344
        $region40: #{tpu_custom_call.1} parent=27 // pred_fallthru
          _
        // Predicated region
        $region41: #{tpu_custom_call.1} parent=27 // pred_check
          %p372 = pneg %p135
        $region42: #{tpu_custom_call.1} parent=27 // pred_check_branch
          %374 = sbr.rel (%p372) target = $region44
        $region43: #{tpu_custom_call.1} parent=27 // pred_region
          %s376 = ssub.s32 64, 64
          %377 = vsyncadd %s349, %s376
          %s378 = sadd.s32 %s31, %s30
          %s379 = smul.addr %s378, 64
          %s380 = scalar_lea.hbm %s3, %s379
          %s382 = sshll.u32 %s352, 4
          %s383 = int_to_ptr.vmem [resolvable:$true] %s382
          %385 = dma.vmem_to_hbm [thread:$0]  %s383, 64, %s380, %s349
        $region44: #{tpu_custom_call.1} parent=27 // pred_fallthru
          _
        // Predicated region
        $region45: #{tpu_custom_call.1} parent=27 // pred_check
          %p386 = pneg %p163
        $region46: #{tpu_custom_call.1} parent=27 // pred_check_branch
          %388 = sbr.rel (%p386) target = $region48
        $region47: #{tpu_custom_call.1} parent=27 // pred_region
          %s390 = ssub.s32 64, 64
          %391 = vsyncadd %s354, %s390
          %s392 = sadd.s32 %s31, %s30
          %s393 = smul.addr %s392, 64
          %s394 = scalar_lea.hbm %s4, %s393
          %s396 = sshll.u32 %s357, 4
          %s397 = int_to_ptr.vmem [resolvable:$true] %s396
          %399 = dma.vmem_to_hbm [thread:$0]  %s397, 64, %s394, %s354
        $region48: #{tpu_custom_call.1} parent=27 // pred_fallthru
          _
      $region28: #{tpu_custom_call.1} parent=5 // pred_fallthru
        _
      %p400 = scmp.le.s32.totalorder 2, %s21
      // Predicated region
      $region49: #{tpu_custom_call.1} parent=5 // pred_check
        %p401 = pneg %p400
      $region50: #{tpu_custom_call.1} parent=5 // pred_check_branch
        %403 = sbr.rel (%p401) target = $region52
      $region51: #{tpu_custom_call.1} parent=5 // pred_region
        %s404 = ssub.s32 %s21, 2
        // Predicated region
        $region53: #{tpu_custom_call.1} parent=51 // pred_check
          %p405 = pneg %p113
        $region54: #{tpu_custom_call.1} parent=51 // pred_check_branch
          %407 = sbr.rel (%p405) target = $region56
        $region55: #{tpu_custom_call.1} parent=51 // pred_region
          %s408 = sand.u32 %s98, 1
          %s409 = scalar_lea.sflag [#allocation4], %s408
          %s410 = sand.u32 %s98, 1
          %s411 = smul.addr %s410, 4
          %s412 = scalar_lea.vmem [#allocation7], %s411
          %413 = dma.done %s409, 64
        $region56: #{tpu_custom_call.1} parent=51 // pred_fallthru
          _
        // Predicated region
        $region57: #{tpu_custom_call.1} parent=51 // pred_check
          %p414 = pneg %p141
        $region58: #{tpu_custom_call.1} parent=51 // pred_check_branch
          %416 = sbr.rel (%p414) target = $region60
        $region59: #{tpu_custom_call.1} parent=51 // pred_region
          %s417 = sand.u32 %s27, 1
          %s418 = scalar_lea.sflag [#allocation9], %s417
          %s419 = sand.u32 %s126, 1
          %s420 = smul.addr %s419, 4
          %s421 = scalar_lea.vmem [#allocation8], %s420
          %422 = dma.done %s418, 64
        $region60: #{tpu_custom_call.1} parent=51 // pred_fallthru
          _
        // Predicated region
        $region61: #{tpu_custom_call.1} parent=51 // pred_check
          %p423 = pneg %p169
        $region62: #{tpu_custom_call.1} parent=51 // pred_check_branch
          %425 = sbr.rel (%p423) target = $region64
        $region63: #{tpu_custom_call.1} parent=51 // pred_region
          %s426 = sand.u32 %s27, 1
          %s427 = scalar_lea.sflag [#allocation9], %s426
          %s428 = sand.u32 %s154, 1
          %s429 = smul.addr %s428, 4
          %s430 = scalar_lea.vmem [#allocation10], %s429
          %431 = dma.done %s427, 64
        $region64: #{tpu_custom_call.1} parent=51 // pred_fallthru
          _
      $region52: #{tpu_custom_call.1} parent=5 // pred_fallthru
        _
    $region6: #{tpu_custom_call.1} parent=1 // loop_footer
      %s25 = sadd.s32 1, %s21
    $region7: #{tpu_custom_call.1} parent=1 // loop_footer_branch
      %20 = sbr.rel target = $region3
    $region8: #{tpu_custom_call.1} parent=1 // loop_exit
      _
    %432 = vsyncpa [#allocation3], 1
    %s433 = scalar_lea.sflag [#allocation3], 1
    %434 = vsyncpa %s433, 1
    %435 = vsyncpa [#allocation6], 1
    %436 = vsyncpa [#allocation4], 1
    %s437 = scalar_lea.sflag [#allocation4], 1
    %438 = vsyncpa %s437, 1
    %439 = vsyncpa [#allocation9], 1
    %s440 = scalar_lea.sflag [#allocation9], 1
    %441 = vsyncpa %s440, 1

</llo_original>
